<compile_context>
chip_gen: v6e
topology: v6e:2x2x1
jax: 0.10.0
libtpu: 0.0.40
codegen_flags: <defaults>
</compile_context>

<pallas_src>
import jax
import jax.numpy as jnp
from jax.experimental import pallas as pl
from jax.experimental.pallas import tpu as pltpu


def vfe_kernel(x_ref, w_ref, bias_ref, o_ref):
    # x_ref:    (bv, T, Cin)  block of voxels
    # w_ref:    (Cin, U)      linear weight with BN scale pre-folded
    # bias_ref: (1, U)        fused BN bias = beta - mean * scale
    # o_ref:    (bv, T, 2*U)
    bv, T, Cin = x_ref.shape
    U = w_ref.shape[1]

    # Flattened (long-M) matmul on the MXU, accumulate in f32.
    x2d = x_ref[...].reshape(bv * T, Cin)
    y = jnp.dot(x2d, w_ref[...], preferred_element_type=jnp.float32)

    # Fused eval-mode BN bias (scale already folded into weight), then ReLU.
    y = y + bias_ref[...]
    pointwise = jnp.maximum(y, 0.0).reshape(bv, T, U)          # (bv, T, U)

    # Max over points (dim=1, keepdim) -> repeated half of the output.
    aggregated = jnp.max(pointwise, axis=1, keepdims=True)     # (bv, 1, U)

    # Two direct slice stores (no materialized concat).
    o_ref[..., :U] = pointwise.astype(o_ref.dtype)
    o_ref[..., U:] = jnp.broadcast_to(aggregated, (bv, T, U)).astype(o_ref.dtype)


def vfe_layer(x, weight, gamma, beta, running_mean, running_var,
              *, eps=1e-3, block_v=1024):
    """x: (V, T, Cin) float32; weight: (Cin, U); BN params: (U,)."""
    V, T, Cin = x.shape
    U = weight.shape[1]

    # Fold BN (eval mode, eps=1e-3 as in the module) into the weight + bias.
    scale = (gamma / jnp.sqrt(running_var + eps)).astype(jnp.float32)     # (U,)
    w_scaled = (weight * scale[None, :]).astype(jnp.float32)              # (Cin, U)
    bias = (beta - running_mean * scale).reshape(1, U).astype(jnp.float32)

    # Tile over voxels; pad V up to a multiple of block_v (padded voxels are
    # fully independent, their outputs are sliced off below).
    block_v = max(1, min(block_v, V))
    grid_v = pl.cdiv(V, block_v)
    Vp = grid_v * block_v
    if Vp != V:
        x = jnp.pad(x, ((0, Vp - V), (0, 0), (0, 0)))

    out = pl.pallas_call(
        vfe_kernel,
        out_shape=jax.ShapeDtypeStruct((Vp, T, 2 * U), x.dtype),
        grid_spec=pltpu.PrefetchScalarGridSpec(
            num_scalar_prefetch=0,
            grid=(grid_v,),
            in_specs=[
                pl.BlockSpec((block_v, T, Cin), lambda i: (i, 0, 0)),
                pl.BlockSpec((Cin, U), lambda i: (0, 0)),
                pl.BlockSpec((1, U), lambda i: (0, 0)),
            ],
            out_specs=pl.BlockSpec((block_v, T, 2 * U), lambda i: (i, 0, 0)),
        ),
        compiler_params=pltpu.CompilerParams(
            dimension_semantics=("parallel",),
            vmem_limit_bytes=48 * 1024 * 1024,
        ),
    )(x, w_scaled, bias)

    return out[:V] if Vp != V else out


def vfe_layer_ref(x, weight, gamma, beta, running_mean, running_var, *, eps=1e-3):
    y = jnp.einsum("vtc,cu->vtu", x, weight)
    y = (y - running_mean) / jnp.sqrt(running_var + eps) * gamma + beta
    pw = jnp.maximum(y, 0.0)
    agg = jnp.max(pw, axis=1, keepdims=True)
    rep = jnp.broadcast_to(agg, pw.shape)
    return jnp.concatenate([pw, rep], axis=-1)


if __name__ == "__main__":
    # Small shapes consistent with VFELayer(in_channels=16, out_channels=64):
    #   units = out_channels // 2 = 32.  V=10 is deliberately not a multiple of
    #   the explicit block_v=4 below, to exercise the padding path.
    V, T, C_in, C_out = 10, 16, 16, 64
    U = C_out // 2

    key = jax.random.PRNGKey(0)
    kx, kw, kg, kb, km, kv = jax.random.split(key, 6)

    x = jax.random.normal(kx, (V, T, C_in), dtype=jnp.float32)
    weight = jax.random.normal(kw, (C_in, U), dtype=jnp.float32) * 0.1   # Linear(bias=False)
    gamma = 1.0 + 0.1 * jax.random.normal(kg, (U,), dtype=jnp.float32)   # BN weight
    beta = 0.1 * jax.random.normal(kb, (U,), dtype=jnp.float32)          # BN bias
    running_mean = 0.1 * jax.random.normal(km, (U,), dtype=jnp.float32)
    running_var = jnp.abs(1.0 + 0.1 * jax.random.normal(kv, (U,), dtype=jnp.float32))

    ref = vfe_layer_ref(x, weight, gamma, beta, running_mean, running_var)

    # Default (large) tile: block_v clamps to V, single grid step.
    out = vfe_layer(x, weight, gamma, beta, running_mean, running_var)
    out = jax.block_until_ready(out)
    assert out.shape == (V, T, C_out), out.shape
    assert jnp.allclose(out, ref, atol=1e-4, rtol=1e-4), "mismatch vs reference"

    # Small tile with padding (V=10 -> padded to 12, 3 grid steps).
    out2 = vfe_layer(x, weight, gamma, beta, running_mean, running_var, block_v=4)
    out2 = jax.block_until_ready(out2)
    assert out2.shape == (V, T, C_out), out2.shape
    assert jnp.allclose(out2, ref, atol=1e-4, rtol=1e-4), "mismatch vs reference (padded path)"

    print("KERNEL_OK")
</pallas_src>

<mosaic_0001>
module attributes {stable_mosaic.version = 11 : i64} {
  func.func @vfe_kernel(%arg0: i32, %arg1: memref<10x16x16xf32, #tpu.memory_space<vmem>>, %arg2: memref<16x32xf32, #tpu.memory_space<vmem>>, %arg3: memref<1x32xf32, #tpu.memory_space<vmem>>, %arg4: memref<10x16x64xf32, #tpu.memory_space<vmem>>) attributes {dimension_semantics = [#tpu.dimension_semantics<parallel>], iteration_bounds = array<i64: 1>, scalar_prefetch = 0 : i64, scratch_operands = 0 : i64, tpu.core_type = #tpu.core_type<tc>, window_params = [{transform_indices = @transform_0, window_bounds = array<i64: 10, 16, 16>}, {pipeline_mode = #tpu.pipeline_mode<synchronous>, transform_indices = @transform_1, window_bounds = array<i64: 16, 32>}, {pipeline_mode = #tpu.pipeline_mode<synchronous>, transform_indices = @transform_2, window_bounds = array<i64: 1, 32>}, {transform_indices = @transform_3, window_bounds = array<i64: 10, 16, 64>}]} {
    %c0 = arith.constant 0 : index
    %c0_0 = arith.constant 0 : index
    %c0_1 = arith.constant 0 : index
    %0 = vector.load %arg1[%c0, %c0_0, %c0_1] : memref<10x16x16xf32, #tpu.memory_space<vmem>>, vector<10x16x16xf32>
    %1 = vector.shape_cast %0 : vector<10x16x16xf32> to vector<160x16xf32>
    %c0_2 = arith.constant 0 : index
    %c0_3 = arith.constant 0 : index
    %2 = vector.load %arg2[%c0_2, %c0_3] : memref<16x32xf32, #tpu.memory_space<vmem>>, vector<16x32xf32>
    %cst = arith.constant dense<0.000000e+00> : vector<160x32xf32>
    %3 = tpu.matmul %1, %2, %cst {dimension_numbers = #tpu.dot_dimension_numbers<[1], [0], [0], [1], [0, 0, 1, 1], [], []>} : vector<160x16xf32>, vector<16x32xf32>, vector<160x32xf32> -> vector<160x32xf32>
    %c0_4 = arith.constant 0 : index
    %c0_5 = arith.constant 0 : index
    %4 = vector.load %arg3[%c0_4, %c0_5] : memref<1x32xf32, #tpu.memory_space<vmem>>, vector<1x32xf32>
    %5 = vector.broadcast %4 : vector<1x32xf32> to vector<160x32xf32>
    %6 = arith.addf %3, %5 : vector<160x32xf32>
    %cst_6 = arith.constant 0.000000e+00 : f32
    %7 = vector.broadcast %cst_6 : f32 to vector<160x32xf32>
    %8 = arith.maximumf %6, %7 : vector<160x32xf32>
    %9 = vector.shape_cast %8 : vector<160x32xf32> to vector<10x16x32xf32>
    %cst_7 = arith.constant dense<0xFF800000> : vector<10x32xf32>
    %10 = vector.multi_reduction <maximumf>, %9, %cst_7 [1] : vector<10x16x32xf32> to vector<10x32xf32>
    %11 = vector.shape_cast %10 : vector<10x32xf32> to vector<10x1x32xf32>
    %c0_8 = arith.constant 0 : index
    %c0_9 = arith.constant 0 : index
    %c0_10 = arith.constant 0 : index
    %12 = vector.load %arg4[%c0_8, %c0_9, %c0_10] : memref<10x16x64xf32, #tpu.memory_space<vmem>>, vector<10x16x32xf32>
    tpu.vector_store %arg4[%c0_8, %c0_9, %c0_10], %9 {strides = array<i32>} : memref<10x16x64xf32, #tpu.memory_space<vmem>>, vector<10x16x32xf32>,
    %13 = vector.shape_cast %11 : vector<10x1x32xf32> to vector<10x1x32xf32>
    %14 = vector.broadcast %13 : vector<10x1x32xf32> to vector<10x16x32xf32>
    %c0_11 = arith.constant 0 : index
    %c0_12 = arith.constant 0 : index
    %c32 = arith.constant 32 : index
    %15 = vector.load %arg4[%c0_11, %c0_12, %c32] : memref<10x16x64xf32, #tpu.memory_space<vmem>>, vector<10x16x32xf32>
    tpu.vector_store %arg4[%c0_11, %c0_12, %c32], %14 {strides = array<i32>} : memref<10x16x64xf32, #tpu.memory_space<vmem>>, vector<10x16x32xf32>,
    return
  }
  func.func @transform_0(%arg0: i32) -> (i32, i32, i32) {
    %c0_i32 = arith.constant 0 : i32
    %c0_i32_0 = arith.constant 0 : i32
    %c0_i32_1 = arith.constant 0 : i32
    return %arg0, %c0_i32, %c0_i32_0 : i32, i32, i32
  }
  func.func @transform_1(%arg0: i32) -> (i32, i32) {
    %c0_i32 = arith.constant 0 : i32
    %c0_i32_0 = arith.constant 0 : i32
    %c0_i32_1 = arith.constant 0 : i32
    return %c0_i32, %c0_i32_0 : i32, i32
  }
  func.func @transform_2(%arg0: i32) -> (i32, i32) {
    %c0_i32 = arith.constant 0 : i32
    %c0_i32_0 = arith.constant 0 : i32
    %c0_i32_1 = arith.constant 0 : i32
    return %c0_i32, %c0_i32_0 : i32, i32
  }
  func.func @transform_3(%arg0: i32) -> (i32, i32, i32) {
    %c0_i32 = arith.constant 0 : i32
    %c0_i32_0 = arith.constant 0 : i32
    %c0_i32_1 = arith.constant 0 : i32
    return %arg0, %c0_i32, %c0_i32_0 : i32, i32, i32
  }
}

</mosaic_0001>

<llo_original>
// kernel: tpu_custom_call.1
$region0: #{tpu_custom_call.1}
  #allocation0 [shape = 'u32[]', space=smem, size = 0x4, offset = 0x4, fixed_abs, tag = 'smem constant byte address 0x4 - core index']
  #allocation1 [shape = 'u32[144,128]{1,0:T(1,128)}', space=vmem, size = 0x12000, scoped, tag = 'internal scratch']
  %s0 = inlined_call_operand.hbm [shape: f32[10,16,16], index: 0, kind: input, shape index: {}]
  %s1 = inlined_call_operand.hbm [shape: f32[16,32], index: 1, kind: input, shape index: {}]
  %s2 = inlined_call_operand.vmem [shape: f32[1,32], index: 2, kind: input, shape index: {}]
  %s3 = inlined_call_operand.hbm [shape: f32[10,16,64], index: 3, kind: output, shape index: {}]
  %s4 = sld [smem:[#allocation0]]
  $region30: #{tpu_custom_call.1} parent=0
    _
  %s6 = ssub.s32 1, %s4
  %s7 = scalar_select 0, %s6, %s4
  $region1: #{tpu_custom_call.1} parent=0
    #allocation2 [shape = 'u8[81920]{0}', space=vmem, size = 0x14000, scoped, tag = 'input window, operand 0, single buffered']
    #allocation3 [shape = 's32[1]{0}', space=sflag, size = 0x4, scoped, tag = 'scoped memory for tpu_custom_call.1']
    #allocation4 [shape = 's32[1]{0}', space=sflag, size = 0x4, scoped, tag = 'scoped memory for tpu_custom_call.1']
    #allocation5 [shape = 'u8[8192]{0}', space=vmem, size = 0x2000, scoped, tag = 'input window, operand 1, single buffered']
    #allocation6 [shape = 's32[1]{0}', space=sflag, size = 0x4, scoped, tag = 'scoped memory for tpu_custom_call.1']
    #allocation7 [shape = 'u8[81920]{0}', space=vmem, size = 0x14000, scoped, tag = 'output window, operand 0, single buffered']
    %8 = vsyncpa [#allocation3], 0
    %9 = vsyncpa [#allocation6], 0
    %10 = vsyncpa [#allocation4], 0
    // Predicated region
    $region2: #{tpu_custom_call.1} parent=1 // pred_check
      _
    $region3: #{tpu_custom_call.1} parent=1 // pred_check_branch
      %12 = sbr.rel (0) target = $region5
    $region4: #{tpu_custom_call.1} parent=1 // pred_region
      %s14 = ssub.s32 2560, 2560
      %15 = vsyncadd [#allocation3], %s14
      %s16 = sshll.u32 [#allocation2], 4
      %s17 = int_to_ptr.vmem [resolvable:$true] %s16
      %22 = dma.hbm_to_vmem [thread:$0]  %s0, 2560, %s17, [#allocation3], 128, 128, 8
    $region5: #{tpu_custom_call.1} parent=1 // pred_fallthru
      _
    // Predicated region
    $region6: #{tpu_custom_call.1} parent=1 // pred_check
      _
    $region7: #{tpu_custom_call.1} parent=1 // pred_check_branch
      %24 = sbr.rel (0) target = $region9
    $region8: #{tpu_custom_call.1} parent=1 // pred_region
      %s26 = ssub.s32 256, 256
      %27 = vsyncadd [#allocation6], %s26
      %s28 = sshll.u32 [#allocation5], 4
      %s29 = int_to_ptr.vmem [resolvable:$true] %s28
      %34 = dma.hbm_to_vmem [thread:$0]  %s1, 256, %s29, [#allocation6], 128, 128, 8
    $region9: #{tpu_custom_call.1} parent=1 // pred_fallthru
      _
    // Predicated region
    $region10: #{tpu_custom_call.1} parent=1 // pred_check
      _
    $region11: #{tpu_custom_call.1} parent=1 // pred_check_branch
      %36 = sbr.rel (0) target = $region13
    $region12: #{tpu_custom_call.1} parent=1 // pred_region
      _
    $region13: #{tpu_custom_call.1} parent=1 // pred_fallthru
      _
    // Predicated region
    $region14: #{tpu_custom_call.1} parent=1 // pred_check
      _
    $region15: #{tpu_custom_call.1} parent=1 // pred_check_branch
      %38 = sbr.rel (0) target = $region17
    $region16: #{tpu_custom_call.1} parent=1 // pred_region
      %39 = dma.done [#allocation3], 2560
    $region17: #{tpu_custom_call.1} parent=1 // pred_fallthru
      _
    // Predicated region
    $region18: #{tpu_custom_call.1} parent=1 // pred_check
      _
    $region19: #{tpu_custom_call.1} parent=1 // pred_check_branch
      %41 = sbr.rel (0) target = $region21
    $region20: #{tpu_custom_call.1} parent=1 // pred_region
      %42 = dma.done [#allocation6], 256
    $region21: #{tpu_custom_call.1} parent=1 // pred_fallthru
      _
    %v43 = vld [vmem:[#allocation2] sm:$0xff]
    %v44 = vld [vmem:[#allocation2 + $0x8] sm:$0xff]
    %v45 = vld [vmem:[#allocation2 + $0x10] sm:$0xff]
    %v46 = vld [vmem:[#allocation2 + $0x18] sm:$0xff]
    %v47 = vld [vmem:[#allocation2 + $0x20] sm:$0xff]
    %v48 = vld [vmem:[#allocation2 + $0x28] sm:$0xff]
    %v49 = vld [vmem:[#allocation2 + $0x30] sm:$0xff]
    %v50 = vld [vmem:[#allocation2 + $0x38] sm:$0xff]
    %v51 = vld [vmem:[#allocation2 + $0x40] sm:$0xff]
    %v52 = vld [vmem:[#allocation2 + $0x48] sm:$0xff]
    %v53 = vld [vmem:[#allocation2 + $0x50] sm:$0xff]
    %v54 = vld [vmem:[#allocation2 + $0x58] sm:$0xff]
    %v55 = vld [vmem:[#allocation2 + $0x60] sm:$0xff]
    %v56 = vld [vmem:[#allocation2 + $0x68] sm:$0xff]
    %v57 = vld [vmem:[#allocation2 + $0x70] sm:$0xff]
    %v58 = vld [vmem:[#allocation2 + $0x78] sm:$0xff]
    %v59 = vld [vmem:[#allocation2 + $0x80] sm:$0xff]
    %v60 = vld [vmem:[#allocation2 + $0x88] sm:$0xff]
    %v61 = vld [vmem:[#allocation2 + $0x90] sm:$0xff]
    %v62 = vld [vmem:[#allocation2 + $0x98] sm:$0xff]
    %v63 = vld [vmem:[#allocation5] sm:$0xff]
    %v64 = vld [vmem:[#allocation5 + $0x8] sm:$0xff]
    %v65 = vld [vmem:[%s2] sm:$0x1]
    %v67 = vlaneseq
    %v68 = vshrl.u32 %v67, 7
    %v69 = vsub.s32 0, %v68
    %v70 = vrot.slane %v65, %v69
    %vm72 = vcmask 130048
    %v74 = vsel %vm72, %v43, 0
    %v77 = vsel %vm72, %v44, 0
    %v80 = vsel %vm72, %v45, 0
    %v83 = vsel %vm72, %v46, 0
    %v86 = vsel %vm72, %v47, 0
    %v89 = vsel %vm72, %v48, 0
    %v92 = vsel %vm72, %v49, 0
    %v95 = vsel %vm72, %v50, 0
    %v98 = vsel %vm72, %v51, 0
    %v101 = vsel %vm72, %v52, 0
    %v104 = vsel %vm72, %v53, 0
    %v107 = vsel %vm72, %v54, 0
    %v110 = vsel %vm72, %v55, 0
    %v113 = vsel %vm72, %v56, 0
    %v116 = vsel %vm72, %v57, 0
    %v119 = vsel %vm72, %v58, 0
    %v122 = vsel %vm72, %v59, 0
    %v125 = vsel %vm72, %v60, 0
    %v128 = vsel %vm72, %v61, 0
    %v131 = vsel %vm72, %v62, 0
    %133 = vmatprep.subr.mxu0 0.0
    %134 = vmatpush1.msra.mxu0 0.0
    %135 = vmatprep.subr.mxu0 0.0
    %136 = vmatpush1.msra.mxu0 0.0
    %137 = vmatprep.subr.mxu0 0.0
    %138 = vmatpush1.msra.mxu0 0.0
    %139 = vmatprep.subr.mxu0 0.0
    %140 = vmatpush1.msra.mxu0 0.0
    %141 = vmatprep.subr.mxu0 0.0
    %142 = vmatpush1.msra.mxu0 0.0
    %143 = vmatprep.subr.mxu0 0.0
    %144 = vmatpush1.msra.mxu0 0.0
    %145 = vmatprep.subr.mxu0 0.0
    %146 = vmatpush1.msra.mxu0 0.0
    %147 = vmatprep.subr.mxu0 0.0
    %148 = vmatpush1.msra.mxu0 0.0
    %149 = vmatprep.subr.mxu0 0.0
    %150 = vmatpush1.msra.mxu0 0.0
    %151 = vmatprep.subr.mxu0 0.0
    %152 = vmatpush1.msra.mxu0 0.0
    %153 = vmatprep.subr.mxu0 0.0
    %154 = vmatpush1.msra.mxu0 0.0
    %155 = vmatprep.subr.mxu0 0.0
    %156 = vmatpush1.msra.mxu0 0.0
    %157 = vmatprep.subr.mxu0 0.0
    %158 = vmatpush1.msra.mxu0 0.0
    %159 = vmatprep.subr.mxu0 0.0
    %160 = vmatpush1.msra.mxu0 0.0
    %161 = vmatprep.subr.mxu0 0.0
    %162 = vmatpush1.msra.mxu0 %v64
    %163 = vmatprep.subr.mxu0 0.0
    %164 = vmatpush1.msra.mxu0 %v63
    %165 = vmatprep.subr.mxu0 0.0
    %166 = vmatpush2.msra.mxu0 0.0
    %167 = vmatprep.subr.mxu0 0.0
    %168 = vmatpush2.msra.mxu0 0.0
    %169 = vmatprep.subr.mxu0 0.0
    %170 = vmatpush2.msra.mxu0 0.0
    %171 = vmatprep.subr.mxu0 0.0
    %172 = vmatpush2.msra.mxu0 0.0
    %173 = vmatprep.subr.mxu0 0.0
    %174 = vmatpush2.msra.mxu0 0.0
    %175 = vmatprep.subr.mxu0 0.0
    %176 = vmatpush2.msra.mxu0 0.0
    %177 = vmatprep.subr.mxu0 0.0
    %178 = vmatpush2.msra.mxu0 0.0
    %179 = vmatprep.subr.mxu0 0.0
    %180 = vmatpush2.msra.mxu0 0.0
    %181 = vmatprep.subr.mxu0 0.0
    %182 = vmatpush2.msra.mxu0 0.0
    %183 = vmatprep.subr.mxu0 0.0
    %184 = vmatpush2.msra.mxu0 0.0
    %185 = vmatprep.subr.mxu0 0.0
    %186 = vmatpush2.msra.mxu0 0.0
    %187 = vmatprep.subr.mxu0 0.0
    %188 = vmatpush2.msra.mxu0 0.0
    %189 = vmatprep.subr.mxu0 0.0
    %190 = vmatpush2.msra.mxu0 0.0
    %191 = vmatprep.subr.mxu0 0.0
    %192 = vmatpush2.msra.mxu0 0.0
    %193 = vmatprep.subr.mxu0 0.0
    %194 = vmatpush2.msra.mxu0 0.0
    %195 = vmatprep.subr.mxu0 0.0
    %196 = vmatpush2.msra.mxu0 0.0
    %197 = vmatprep.mubr.f32.mxu0 0.0
    %198 = vmatmul.mubr.f32.gmra.mxu0 %v74
    %v199 = vpop.f32.mrf.mxu0
    %v200 = vadd.f32 %v70, %v199
    %v201 = vpop.f32.mrf.mxu0
    %202 = vmatprep.mubr.f32.mxu0 0.0
    %203 = vmatmul.mubr.f32.gmra.mxu0 %v77
    %v204 = vpop.f32.mrf.mxu0
    %v205 = vadd.f32 %v70, %v204
    %v206 = vpop.f32.mrf.mxu0
    %207 = vmatprep.mubr.f32.mxu0 0.0
    %208 = vmatmul.mubr.f32.gmra.mxu0 %v80
    %v209 = vpop.f32.mrf.mxu0
    %v210 = vadd.f32 %v70, %v209
    %v211 = vpop.f32.mrf.mxu0
    %212 = vmatprep.mubr.f32.mxu0 0.0
    %213 = vmatmul.mubr.f32.gmra.mxu0 %v83
    %v214 = vpop.f32.mrf.mxu0
    %v215 = vadd.f32 %v70, %v214
    %v216 = vpop.f32.mrf.mxu0
    %217 = vmatprep.mubr.f32.mxu0 0.0
    %218 = vmatmul.mubr.f32.gmra.mxu0 %v86
    %v219 = vpop.f32.mrf.mxu0
    %v220 = vadd.f32 %v70, %v219
    %v221 = vpop.f32.mrf.mxu0
    %222 = vmatprep.mubr.f32.mxu0 0.0
    %223 = vmatmul.mubr.f32.gmra.mxu0 %v89
    %v224 = vpop.f32.mrf.mxu0
    %v225 = vadd.f32 %v70, %v224
    %v226 = vpop.f32.mrf.mxu0
    %227 = vmatprep.mubr.f32.mxu0 0.0
    %228 = vmatmul.mubr.f32.gmra.mxu0 %v92
    %v229 = vpop.f32.mrf.mxu0
    %v230 = vadd.f32 %v70, %v229
    %v231 = vpop.f32.mrf.mxu0
    %232 = vmatprep.mubr.f32.mxu0 0.0
    %233 = vmatmul.mubr.f32.gmra.mxu0 %v95
    %v234 = vpop.f32.mrf.mxu0
    %v235 = vadd.f32 %v70, %v234
    %v236 = vpop.f32.mrf.mxu0
    %237 = vmatprep.mubr.f32.mxu0 0.0
    %238 = vmatmul.mubr.f32.gmra.mxu0 %v98
    %v239 = vpop.f32.mrf.mxu0
    %v240 = vadd.f32 %v70, %v239
    %v241 = vpop.f32.mrf.mxu0
    %242 = vmatprep.mubr.f32.mxu0 0.0
    %243 = vmatmul.mubr.f32.gmra.mxu0 %v101
    %v244 = vpop.f32.mrf.mxu0
    %v245 = vadd.f32 %v70, %v244
    %v246 = vpop.f32.mrf.mxu0
    %247 = vmatprep.mubr.f32.mxu0 0.0
    %248 = vmatmul.mubr.f32.gmra.mxu0 %v104
    %v249 = vpop.f32.mrf.mxu0
    %v250 = vadd.f32 %v70, %v249
    %v251 = vpop.f32.mrf.mxu0
    %252 = vmatprep.mubr.f32.mxu0 0.0
    %253 = vmatmul.mubr.f32.gmra.mxu0 %v107
    %v254 = vpop.f32.mrf.mxu0
    %v255 = vadd.f32 %v70, %v254
    %v256 = vpop.f32.mrf.mxu0
    %257 = vmatprep.mubr.f32.mxu0 0.0
    %258 = vmatmul.mubr.f32.gmra.mxu0 %v110
    %v259 = vpop.f32.mrf.mxu0
    %v260 = vadd.f32 %v70, %v259
    %v261 = vpop.f32.mrf.mxu0
    %262 = vmatprep.mubr.f32.mxu0 0.0
    %263 = vmatmul.mubr.f32.gmra.mxu0 %v113
    %v264 = vpop.f32.mrf.mxu0
    %v265 = vadd.f32 %v70, %v264
    %v266 = vpop.f32.mrf.mxu0
    %267 = vmatprep.mubr.f32.mxu0 0.0
    %268 = vmatmul.mubr.f32.gmra.mxu0 %v116
    %v269 = vpop.f32.mrf.mxu0
    %v270 = vadd.f32 %v70, %v269
    %v271 = vpop.f32.mrf.mxu0
    %272 = vmatprep.mubr.f32.mxu0 0.0
    %273 = vmatmul.mubr.f32.gmra.mxu0 %v119
    %v274 = vpop.f32.mrf.mxu0
    %v275 = vadd.f32 %v70, %v274
    %v276 = vpop.f32.mrf.mxu0
    %277 = vmatprep.mubr.f32.mxu0 0.0
    %278 = vmatmul.mubr.f32.gmra.mxu0 %v122
    %v279 = vpop.f32.mrf.mxu0
    %v280 = vadd.f32 %v70, %v279
    %v281 = vpop.f32.mrf.mxu0
    %282 = vmatprep.mubr.f32.mxu0 0.0
    %283 = vmatmul.mubr.f32.gmra.mxu0 %v125
    %v284 = vpop.f32.mrf.mxu0
    %v285 = vadd.f32 %v70, %v284
    %v286 = vpop.f32.mrf.mxu0
    %287 = vmatprep.mubr.f32.mxu0 0.0
    %288 = vmatmul.mubr.f32.gmra.mxu0 %v128
    %v289 = vpop.f32.mrf.mxu0
    %v290 = vadd.f32 %v70, %v289
    %v291 = vpop.f32.mrf.mxu0
    %292 = vmatprep.mubr.f32.mxu0 0.0
    %293 = vmatmul.mubr.f32.gmra.mxu0 %v131
    %v294 = vpop.f32.mrf.mxu0
    %v295 = vadd.f32 %v70, %v294
    %v296 = vpop.f32.mrf.mxu0
    %297 = vdwg.mxu0
    %v298 = vmax.f32 %v200, 0.0
    %v299 = vmax.f32 %v205, 0.0
    %v300 = vmax.f32 %v210, 0.0
    %v301 = vmax.f32 %v215, 0.0
    %v302 = vmax.f32 %v220, 0.0
    %v303 = vmax.f32 %v225, 0.0
    %v304 = vmax.f32 %v230, 0.0
    %v305 = vmax.f32 %v235, 0.0
    %v306 = vmax.f32 %v240, 0.0
    %v307 = vmax.f32 %v245, 0.0
    %v308 = vmax.f32 %v250, 0.0
    %v309 = vmax.f32 %v255, 0.0
    %v310 = vmax.f32 %v260, 0.0
    %v311 = vmax.f32 %v265, 0.0
    %v312 = vmax.f32 %v270, 0.0
    %v313 = vmax.f32 %v275, 0.0
    %v314 = vmax.f32 %v280, 0.0
    %v315 = vmax.f32 %v285, 0.0
    %v316 = vmax.f32 %v290, 0.0
    %v317 = vmax.f32 %v295, 0.0
    %vm318 = vcmask 261120
    %v319 = vsel %vm318, %v298, -inf
    %v320 = vsel %vm318, %v299, -inf
    %v321 = vmax.f32 %v319, %v320
    %v322 = vrot.slane %v321, 4
    %v323 = vmax.f32 %v321, %v322
    %v324 = vrot.slane %v323, 2
    %v325 = vmax.f32 %v323, %v324
    %v326 = vrot.slane %v325, 1
    %v327 = vmax.f32 %v325, %v326
    %v328 = vsel %vm318, %v300, -inf
    %v329 = vsel %vm318, %v301, -inf
    %v330 = vmax.f32 %v328, %v329
    %v331 = vrot.slane %v330, 4
    %v332 = vmax.f32 %v330, %v331
    %v333 = vrot.slane %v332, 2
    %v334 = vmax.f32 %v332, %v333
    %v335 = vrot.slane %v334, 1
    %v336 = vmax.f32 %v334, %v335
    %v337 = vsel %vm318, %v302, -inf
    %v338 = vsel %vm318, %v303, -inf
    %v339 = vmax.f32 %v337, %v338
    %v340 = vrot.slane %v339, 4
    %v341 = vmax.f32 %v339, %v340
    %v342 = vrot.slane %v341, 2
    %v343 = vmax.f32 %v341, %v342
    %v344 = vrot.slane %v343, 1
    %v345 = vmax.f32 %v343, %v344
    %v346 = vsel %vm318, %v304, -inf
    %v347 = vsel %vm318, %v305, -inf
    %v348 = vmax.f32 %v346, %v347
    %v349 = vrot.slane %v348, 4
    %v350 = vmax.f32 %v348, %v349
    %v351 = vrot.slane %v350, 2
    %v352 = vmax.f32 %v350, %v351
    %v353 = vrot.slane %v352, 1
    %v354 = vmax.f32 %v352, %v353
    %v355 = vsel %vm318, %v306, -inf
    %v356 = vsel %vm318, %v307, -inf
    %v357 = vmax.f32 %v355, %v356
    %v358 = vrot.slane %v357, 4
    %v359 = vmax.f32 %v357, %v358
    %v360 = vrot.slane %v359, 2
    %v361 = vmax.f32 %v359, %v360
    %v362 = vrot.slane %v361, 1
    %v363 = vmax.f32 %v361, %v362
    %v364 = vsel %vm318, %v308, -inf
    %v365 = vsel %vm318, %v309, -inf
    %v366 = vmax.f32 %v364, %v365
    %v367 = vrot.slane %v366, 4
    %v368 = vmax.f32 %v366, %v367
    %v369 = vrot.slane %v368, 2
    %v370 = vmax.f32 %v368, %v369
    %v371 = vrot.slane %v370, 1
    %v372 = vmax.f32 %v370, %v371
    %v373 = vsel %vm318, %v310, -inf
    %v374 = vsel %vm318, %v311, -inf
    %v375 = vmax.f32 %v373, %v374
    %v376 = vrot.slane %v375, 4
    %v377 = vmax.f32 %v375, %v376
    %v378 = vrot.slane %v377, 2
    %v379 = vmax.f32 %v377, %v378
    %v380 = vrot.slane %v379, 1
    %v381 = vmax.f32 %v379, %v380
    %v382 = vsel %vm318, %v312, -inf
    %v383 = vsel %vm318, %v313, -inf
    %v384 = vmax.f32 %v382, %v383
    %v385 = vrot.slane %v384, 4
    %v386 = vmax.f32 %v384, %v385
    %v387 = vrot.slane %v386, 2
    %v388 = vmax.f32 %v386, %v387
    %v389 = vrot.slane %v388, 1
    %v390 = vmax.f32 %v388, %v389
    %v391 = vsel %vm318, %v314, -inf
    %v392 = vsel %vm318, %v315, -inf
    %v393 = vmax.f32 %v391, %v392
    %v394 = vrot.slane %v393, 4
    %v395 = vmax.f32 %v393, %v394
    %v396 = vrot.slane %v395, 2
    %v397 = vmax.f32 %v395, %v396
    %v398 = vrot.slane %v397, 1
    %v399 = vmax.f32 %v397, %v398
    %v400 = vsel %vm318, %v316, -inf
    %v401 = vsel %vm318, %v317, -inf
    %v402 = vmax.f32 %v400, %v401
    %v403 = vrot.slane %v402, 4
    %v404 = vmax.f32 %v402, %v403
    %v405 = vrot.slane %v404, 2
    %v406 = vmax.f32 %v404, %v405
    %v407 = vrot.slane %v406, 1
    %v408 = vmax.f32 %v406, %v407
    %409 = vst.msk [vmem:[#allocation7] sm:$0xff] %vm318, %v298
    %410 = vst.msk [vmem:[#allocation7 + $0x8] sm:$0xff] %vm318, %v299
    %411 = vst.msk [vmem:[#allocation7 + $0x10] sm:$0xff] %vm318, %v300
    %412 = vst.msk [vmem:[#allocation7 + $0x18] sm:$0xff] %vm318, %v301
    %413 = vst.msk [vmem:[#allocation7 + $0x20] sm:$0xff] %vm318, %v302
    %414 = vst.msk [vmem:[#allocation7 + $0x28] sm:$0xff] %vm318, %v303
    %415 = vst.msk [vmem:[#allocation7 + $0x30] sm:$0xff] %vm318, %v304
    %416 = vst.msk [vmem:[#allocation7 + $0x38] sm:$0xff] %vm318, %v305
    %417 = vst.msk [vmem:[#allocation7 + $0x40] sm:$0xff] %vm318, %v306
    %418 = vst.msk [vmem:[#allocation7 + $0x48] sm:$0xff] %vm318, %v307
    %419 = vst.msk [vmem:[#allocation7 + $0x50] sm:$0xff] %vm318, %v308
    %420 = vst.msk [vmem:[#allocation7 + $0x58] sm:$0xff] %vm318, %v309
    %421 = vst.msk [vmem:[#allocation7 + $0x60] sm:$0xff] %vm318, %v310
    %422 = vst.msk [vmem:[#allocation7 + $0x68] sm:$0xff] %vm318, %v311
    %423 = vst.msk [vmem:[#allocation7 + $0x70] sm:$0xff] %vm318, %v312
    %424 = vst.msk [vmem:[#allocation7 + $0x78] sm:$0xff] %vm318, %v313
    %425 = vst.msk [vmem:[#allocation7 + $0x80] sm:$0xff] %vm318, %v314
    %426 = vst.msk [vmem:[#allocation7 + $0x88] sm:$0xff] %vm318, %v315
    %427 = vst.msk [vmem:[#allocation7 + $0x90] sm:$0xff] %vm318, %v316
    %428 = vst.msk [vmem:[#allocation7 + $0x98] sm:$0xff] %vm318, %v317
    %439 = vrot.lane.b32.xlu0 %v327, 32
    %v440 = vpop.permute.xlu0 %439
    %441 = vrot.lane.b32.xlu0 %v336, 32
    %v442 = vpop.permute.xlu0 %441
    %443 = vrot.lane.b32.xlu0 %v345, 32
    %v444 = vpop.permute.xlu0 %443
    %445 = vrot.lane.b32.xlu0 %v354, 32
    %v446 = vpop.permute.xlu0 %445
    %447 = vrot.lane.b32.xlu0 %v363, 32
    %v448 = vpop.permute.xlu0 %447
    %449 = vrot.lane.b32.xlu0 %v372, 32
    %v450 = vpop.permute.xlu0 %449
    %451 = vrot.lane.b32.xlu0 %v381, 32
    %v452 = vpop.permute.xlu0 %451
    %453 = vrot.lane.b32.xlu0 %v390, 32
    %v454 = vpop.permute.xlu0 %453
    %455 = vrot.lane.b32.xlu0 %v399, 32
    %v456 = vpop.permute.xlu0 %455
    %457 = vrot.lane.b32.xlu0 %v408, 32
    %v458 = vpop.permute.xlu0 %457
    %vm469 = vcmask 523520
    %470 = vst.msk [vmem:[#allocation7] sm:$0xff] %vm469, %v440
    %471 = vst.msk [vmem:[#allocation7 + $0x8] sm:$0xff] %vm469, %v440
    %472 = vst.msk [vmem:[#allocation7 + $0x10] sm:$0xff] %vm469, %v442
    %473 = vst.msk [vmem:[#allocation7 + $0x18] sm:$0xff] %vm469, %v442
    %474 = vst.msk [vmem:[#allocation7 + $0x20] sm:$0xff] %vm469, %v444
    %475 = vst.msk [vmem:[#allocation7 + $0x28] sm:$0xff] %vm469, %v444
    %476 = vst.msk [vmem:[#allocation7 + $0x30] sm:$0xff] %vm469, %v446
    %477 = vst.msk [vmem:[#allocation7 + $0x38] sm:$0xff] %vm469, %v446
    %478 = vst.msk [vmem:[#allocation7 + $0x40] sm:$0xff] %vm469, %v448
    %479 = vst.msk [vmem:[#allocation7 + $0x48] sm:$0xff] %vm469, %v448
    %480 = vst.msk [vmem:[#allocation7 + $0x50] sm:$0xff] %vm469, %v450
    %481 = vst.msk [vmem:[#allocation7 + $0x58] sm:$0xff] %vm469, %v450
    %482 = vst.msk [vmem:[#allocation7 + $0x60] sm:$0xff] %vm469, %v452
    %483 = vst.msk [vmem:[#allocation7 + $0x68] sm:$0xff] %vm469, %v452
    %484 = vst.msk [vmem:[#allocation7 + $0x70] sm:$0xff] %vm469, %v454
    %485 = vst.msk [vmem:[#allocation7 + $0x78] sm:$0xff] %vm469, %v454
    %486 = vst.msk [vmem:[#allocation7 + $0x80] sm:$0xff] %vm469, %v456
    %487 = vst.msk [vmem:[#allocation7 + $0x88] sm:$0xff] %vm469, %v456
    %488 = vst.msk [vmem:[#allocation7 + $0x90] sm:$0xff] %vm469, %v458
    %489 = vst.msk [vmem:[#allocation7 + $0x98] sm:$0xff] %vm469, %v458
    // Predicated region
    $region22: #{tpu_custom_call.1} parent=1 // pred_check
      _
    $region23: #{tpu_custom_call.1} parent=1 // pred_check_branch
      %491 = sbr.rel (0) target = $region25
    $region24: #{tpu_custom_call.1} parent=1 // pred_region
      %s493 = ssub.s32 2560, 2560
      %494 = vsyncadd [#allocation4], %s493
      %s495 = sshll.u32 [#allocation7], 4
      %s496 = int_to_ptr.vmem [resolvable:$true] %s495
      %501 = dma.vmem_to_hbm [thread:$0]  %s496, 2560, %s3, [#allocation4], 128, 128, 8
    $region25: #{tpu_custom_call.1} parent=1 // pred_fallthru
      _
    // Predicated region
    $region26: #{tpu_custom_call.1} parent=1 // pred_check
      _
    $region27: #{tpu_custom_call.1} parent=1 // pred_check_branch
      %503 = sbr.rel (0) target = $region29
    $region28: #{tpu_custom_call.1} parent=1 // pred_region
      %504 = dma.done [#allocation4], 2560
    $region29: #{tpu_custom_call.1} parent=1 // pred_fallthru
      _
    %505 = vsyncpa [#allocation3], 1
    %506 = vsyncpa [#allocation6], 1
    %507 = vsyncpa [#allocation4], 1

</llo_original>
